<compile_context>
chip_gen: v6e
topology: v6e:2x2x1
jax: 0.10.0
libtpu: 0.0.40
codegen_flags: <defaults>
</compile_context>

<pallas_src>
import jax
import jax.numpy as jnp
from jax.experimental import pallas as pl
from jax.experimental.pallas import tpu as pltpu

NH = 32           # hidden width (matches `nh = 32` in the reference file)
NY = 16           # output width
PACK = 8          # tokens packed per lane-row: 8 * 32 = 256 lanes, 8 * 16 = 128 lanes
TILE_ROWS = 1024  # packed rows per grid step (= 8192 tokens); sweepable

assert (PACK * NH) % 128 == 0 and (PACK * NY) % 128 == 0, "lane packing must be 128-dense"


def _ffn_kernel(x_ref, w1_ref, b1_ref, w2_ref, b2_ref, o_ref):
    # x_ref : (TILE, PACK*NH)      w1_ref: (PACK*NH, PACK*NH)   b1_ref: (1, PACK*NH)
    # w2_ref: (PACK*NH, PACK*NY)   b2_ref: (1, PACK*NY)         o_ref : (TILE, PACK*NY)
    x = x_ref[...]
    h = jnp.dot(x, w1_ref[...], preferred_element_type=jnp.float32)
    h = jnp.maximum(h + b1_ref[...], 0.0)                      # bias + ReLU on f32 acc
    y = jnp.dot(h.astype(w2_ref.dtype), w2_ref[...],
                preferred_element_type=jnp.float32)
    o_ref[...] = (y + b2_ref[...]).astype(o_ref.dtype)


def position_wise_ffn(x, w1, b1, w2, b2, *, tile_rows=TILE_ROWS):
    """x: (..., nh) -> (..., ny); same semantics as the PyTorch module.

    w1: (nh, nh), w2: (nh, ny) stored as (in, out); b1: (nh,)/(1,nh), b2: (ny,)/(1,ny).
    """
    orig_shape = x.shape
    nh = orig_shape[-1]
    ny = w2.shape[1]

    x2d = x.reshape(-1, nh)
    m = x2d.shape[0]

    # ---- pack PACK tokens per lane-row; pad token count so it fits the grid ----
    mp = pl.cdiv(m, PACK)                                    # packed rows needed
    tile = min(tile_rows, max(8, ((mp + 7) // 8) * 8))       # sublane-aligned tile
    grid = pl.cdiv(mp, tile)
    mp_pad = grid * tile                                     # padded packed rows
    m_total = mp_pad * PACK                                  # padded token count

    x_pad = jnp.pad(x2d, ((0, m_total - m), (0, 0)))
    xp = x_pad.reshape(mp_pad, PACK * nh)                    # lane-dense input slab (view)

    # ---- block-diagonal weights / lane-tiled biases (built once per call) ----
    eye = jnp.eye(PACK, dtype=w1.dtype)
    w1_bd = jnp.kron(eye, w1)                                # (PACK*nh, PACK*nh)
    w2_bd = jnp.kron(eye.astype(w2.dtype), w2)               # (PACK*nh, PACK*ny)
    b1_p = jnp.tile(b1.reshape(1, nh), (1, PACK))            # (1, PACK*nh)
    b2_p = jnp.tile(b2.reshape(1, ny), (1, PACK))            # (1, PACK*ny)

    kp_in = PACK * nh
    kp_out = PACK * ny
    itemsize = jnp.dtype(x.dtype).itemsize

    cost = pl.CostEstimate(
        flops=2 * mp_pad * kp_in * (kp_in + kp_out),
        transcendentals=0,
        bytes_accessed=(mp_pad * (kp_in + kp_out) * itemsize
                        + (kp_in * (kp_in + kp_out) + kp_in + kp_out) * itemsize),
    )

    out_packed = pl.pallas_call(
        _ffn_kernel,
        out_shape=jax.ShapeDtypeStruct((mp_pad, kp_out), x.dtype),
        grid_spec=pltpu.PrefetchScalarGridSpec(
            num_scalar_prefetch=0,
            grid=(grid,),
            in_specs=[
                pl.BlockSpec((tile, kp_in), lambda i: (i, 0)),   # X tile (pipelined)
                pl.BlockSpec((kp_in, kp_in), lambda i: (0, 0)),  # W1_bd (resident)
                pl.BlockSpec((1, kp_in), lambda i: (0, 0)),      # b1    (resident)
                pl.BlockSpec((kp_in, kp_out), lambda i: (0, 0)), # W2_bd (resident)
                pl.BlockSpec((1, kp_out), lambda i: (0, 0)),     # b2    (resident)
            ],
            out_specs=pl.BlockSpec((tile, kp_out), lambda i: (i, 0)),
        ),
        compiler_params=pltpu.CompilerParams(
            dimension_semantics=("parallel",)),                  # independent M tiles
        cost_estimate=cost,
    )(xp, w1_bd, b1_p, w2_bd, b2_p)

    # unpack: (mp_pad, PACK*ny) -> (mp_pad*PACK, ny) -> drop padding -> orig shape
    out2d = out_packed.reshape(mp_pad * PACK, ny)[:m]
    return out2d.reshape(orig_shape[:-1] + (ny,))


def _init_params(key, nh, ny, dtype=jnp.float32):
    # Deterministic init mimicking nn.Linear's uniform(-1/sqrt(fan_in), ...).
    k1, k2, k3, k4 = jax.random.split(key, 4)
    bound = 1.0 / jnp.sqrt(nh)
    # Stored as (in, out), i.e. the transpose of torch's (out, in) weight.
    w1 = jax.random.uniform(k1, (nh, nh), dtype, -bound, bound)
    b1 = jax.random.uniform(k2, (nh,), dtype, -bound, bound)
    w2 = jax.random.uniform(k3, (nh, ny), dtype, -bound, bound)
    b2 = jax.random.uniform(k4, (ny,), dtype, -bound, bound)
    return w1, b1, w2, b2


def _ref_ffn(x, w1, b1, w2, b2):
    return jnp.maximum(x @ w1 + b1, 0.0) @ w2 + b2


if __name__ == "__main__":
    key = jax.random.PRNGKey(0)
    kx, kx2, kp = jax.random.split(key, 3)

    w1, b1, w2, b2 = _init_params(kp, NH, NY)

    # Small shape consistent with the module (batch=2, seq=8, hidden=32).
    batch, seq = 2, 8
    x = jax.random.normal(kx, (batch, seq, NH), dtype=jnp.float32)
    out = jax.block_until_ready(position_wise_ffn(x, w1, b1, w2, b2))
    ref = _ref_ffn(x, w1, b1, w2, b2)
    assert out.shape == (batch, seq, NY)
    assert jnp.allclose(out, ref, atol=1e-5, rtol=1e-5)

    # Ragged token count (not a multiple of the 8-token packing) exercises the
    # pad/slice path.
    x2 = jax.random.normal(kx2, (3, 7, NH), dtype=jnp.float32)
    out2 = jax.block_until_ready(position_wise_ffn(x2, w1, b1, w2, b2))
    ref2 = _ref_ffn(x2, w1, b1, w2, b2)
    assert out2.shape == (3, 7, NY)
    assert jnp.allclose(out2, ref2, atol=1e-5, rtol=1e-5)

    print("KERNEL_OK")
</pallas_src>

<mosaic_0001>
module attributes {stable_mosaic.version = 11 : i64} {
  func.func @_ffn_kernel(%arg0: i32, %arg1: memref<8x256xf32, #tpu.memory_space<vmem>>, %arg2: memref<256x256xf32, #tpu.memory_space<vmem>>, %arg3: memref<1x256xf32, #tpu.memory_space<vmem>>, %arg4: memref<256x128xf32, #tpu.memory_space<vmem>>, %arg5: memref<1x128xf32, #tpu.memory_space<vmem>>, %arg6: memref<8x128xf32, #tpu.memory_space<vmem>>) attributes {dimension_semantics = [#tpu.dimension_semantics<parallel>], iteration_bounds = array<i64: 1>, scalar_prefetch = 0 : i64, scratch_operands = 0 : i64, tpu.core_type = #tpu.core_type<tc>, window_params = [{transform_indices = @transform_0, window_bounds = array<i64: 8, 256>}, {pipeline_mode = #tpu.pipeline_mode<synchronous>, transform_indices = @transform_1, window_bounds = array<i64: 256, 256>}, {pipeline_mode = #tpu.pipeline_mode<synchronous>, transform_indices = @transform_2, window_bounds = array<i64: 1, 256>}, {pipeline_mode = #tpu.pipeline_mode<synchronous>, transform_indices = @transform_3, window_bounds = array<i64: 256, 128>}, {pipeline_mode = #tpu.pipeline_mode<synchronous>, transform_indices = @transform_4, window_bounds = array<i64: 1, 128>}, {transform_indices = @transform_5, window_bounds = array<i64: 8, 128>}]} {
    %c0 = arith.constant 0 : index
    %c0_0 = arith.constant 0 : index
    %0 = vector.load %arg1[%c0, %c0_0] : memref<8x256xf32, #tpu.memory_space<vmem>>, vector<8x256xf32>
    %c0_1 = arith.constant 0 : index
    %c0_2 = arith.constant 0 : index
    %1 = vector.load %arg2[%c0_1, %c0_2] : memref<256x256xf32, #tpu.memory_space<vmem>>, vector<256x256xf32>
    %cst = arith.constant dense<0.000000e+00> : vector<8x256xf32>
    %2 = tpu.matmul %0, %1, %cst {dimension_numbers = #tpu.dot_dimension_numbers<[1], [0], [0], [1], [0, 0, 1, 1], [], []>} : vector<8x256xf32>, vector<256x256xf32>, vector<8x256xf32> -> vector<8x256xf32>
    %c0_3 = arith.constant 0 : index
    %c0_4 = arith.constant 0 : index
    %3 = vector.load %arg3[%c0_3, %c0_4] : memref<1x256xf32, #tpu.memory_space<vmem>>, vector<1x256xf32>
    %4 = vector.broadcast %3 : vector<1x256xf32> to vector<8x256xf32>
    %5 = arith.addf %2, %4 : vector<8x256xf32>
    %cst_5 = arith.constant 0.000000e+00 : f32
    %6 = vector.broadcast %cst_5 : f32 to vector<8x256xf32>
    %7 = arith.maximumf %5, %6 : vector<8x256xf32>
    %c0_6 = arith.constant 0 : index
    %c0_7 = arith.constant 0 : index
    %8 = vector.load %arg4[%c0_6, %c0_7] : memref<256x128xf32, #tpu.memory_space<vmem>>, vector<256x128xf32>
    %cst_8 = arith.constant dense<0.000000e+00> : vector<8x128xf32>
    %9 = tpu.matmul %7, %8, %cst_8 {dimension_numbers = #tpu.dot_dimension_numbers<[1], [0], [0], [1], [0, 0, 1, 1], [], []>} : vector<8x256xf32>, vector<256x128xf32>, vector<8x128xf32> -> vector<8x128xf32>
    %c0_9 = arith.constant 0 : index
    %c0_10 = arith.constant 0 : index
    %10 = vector.load %arg5[%c0_9, %c0_10] : memref<1x128xf32, #tpu.memory_space<vmem>>, vector<1x128xf32>
    %11 = vector.broadcast %10 : vector<1x128xf32> to vector<8x128xf32>
    %12 = arith.addf %9, %11 : vector<8x128xf32>
    %c0_11 = arith.constant 0 : index
    %c0_12 = arith.constant 0 : index
    %13 = vector.load %arg6[%c0_11, %c0_12] : memref<8x128xf32, #tpu.memory_space<vmem>>, vector<8x128xf32>
    tpu.vector_store %arg6[%c0_11, %c0_12], %12 {strides = array<i32>} : memref<8x128xf32, #tpu.memory_space<vmem>>, vector<8x128xf32>,
    return
  }
  func.func @transform_0(%arg0: i32) -> (i32, i32) {
    %c0_i32 = arith.constant 0 : i32
    %c0_i32_0 = arith.constant 0 : i32
    return %arg0, %c0_i32 : i32, i32
  }
  func.func @transform_1(%arg0: i32) -> (i32, i32) {
    %c0_i32 = arith.constant 0 : i32
    %c0_i32_0 = arith.constant 0 : i32
    %c0_i32_1 = arith.constant 0 : i32
    return %c0_i32, %c0_i32_0 : i32, i32
  }
  func.func @transform_2(%arg0: i32) -> (i32, i32) {
    %c0_i32 = arith.constant 0 : i32
    %c0_i32_0 = arith.constant 0 : i32
    %c0_i32_1 = arith.constant 0 : i32
    return %c0_i32, %c0_i32_0 : i32, i32
  }
  func.func @transform_3(%arg0: i32) -> (i32, i32) {
    %c0_i32 = arith.constant 0 : i32
    %c0_i32_0 = arith.constant 0 : i32
    %c0_i32_1 = arith.constant 0 : i32
    return %c0_i32, %c0_i32_0 : i32, i32
  }
  func.func @transform_4(%arg0: i32) -> (i32, i32) {
    %c0_i32 = arith.constant 0 : i32
    %c0_i32_0 = arith.constant 0 : i32
    %c0_i32_1 = arith.constant 0 : i32
    return %c0_i32, %c0_i32_0 : i32, i32
  }
  func.func @transform_5(%arg0: i32) -> (i32, i32) {
    %c0_i32 = arith.constant 0 : i32
    %c0_i32_0 = arith.constant 0 : i32
    return %arg0, %c0_i32 : i32, i32
  }
}

</mosaic_0001>

<llo_original>
// kernel: tpu_custom_call.1
$region0: #{tpu_custom_call.1}
  #allocation0 [shape = 'u32[]', space=smem, size = 0x4, offset = 0x4, fixed_abs, tag = 'smem constant byte address 0x4 - core index']
  #allocation1 [shape = 'u32[144,128]{1,0:T(1,128)}', space=vmem, size = 0x12000, scoped, tag = 'internal scratch']
  %s0 = inlined_call_operand.hbm [shape: f32[8,256], index: 0, kind: input, shape index: {}]
  %s1 = inlined_call_operand.hbm [shape: f32[256,256], index: 1, kind: input, shape index: {}]
  %s2 = inlined_call_operand.vmem [shape: f32[1,256], index: 2, kind: input, shape index: {}]
  %s3 = inlined_call_operand.hbm [shape: f32[256,128], index: 3, kind: input, shape index: {}]
  %s4 = inlined_call_operand.vmem [shape: f32[1,128], index: 4, kind: input, shape index: {}]
  %s5 = inlined_call_operand.hbm [shape: f32[8,128], index: 5, kind: output, shape index: {}]
  %s6 = sld [smem:[#allocation0]]
  $region42: #{tpu_custom_call.1} parent=0
    _
  %s8 = ssub.s32 1, %s6
  %s9 = scalar_select 0, %s8, %s6
  $region1: #{tpu_custom_call.1} parent=0
    #allocation2 [shape = 'u8[8192]{0}', space=vmem, size = 0x2000, scoped, tag = 'input window, operand 0, single buffered']
    #allocation3 [shape = 's32[1]{0}', space=sflag, size = 0x4, scoped, tag = 'scoped memory for tpu_custom_call.1']
    #allocation4 [shape = 's32[1]{0}', space=sflag, size = 0x4, scoped, tag = 'scoped memory for tpu_custom_call.1']
    #allocation5 [shape = 'u8[262144]{0}', space=vmem, size = 0x40000, scoped, tag = 'input window, operand 1, single buffered']
    #allocation6 [shape = 's32[1]{0}', space=sflag, size = 0x4, scoped, tag = 'scoped memory for tpu_custom_call.1']
    #allocation7 [shape = 'u8[131072]{0}', space=vmem, size = 0x20000, scoped, tag = 'input window, operand 3, single buffered']
    #allocation8 [shape = 'u8[4096]{0}', space=vmem, size = 0x1000, scoped, tag = 'output window, operand 0, single buffered']
    %10 = vsyncpa [#allocation3], 0
    %11 = vsyncpa [#allocation6], 0
    %12 = vsyncpa [#allocation4], 0
    // Predicated region
    $region2: #{tpu_custom_call.1} parent=1 // pred_check
      _
    $region3: #{tpu_custom_call.1} parent=1 // pred_check_branch
      %14 = sbr.rel (0) target = $region5
    $region4: #{tpu_custom_call.1} parent=1 // pred_region
      %s16 = ssub.s32 256, 256
      %17 = vsyncadd [#allocation3], %s16
      %s19 = sshll.u32 [#allocation2], 4
      %s20 = int_to_ptr.vmem [resolvable:$true] %s19
      %22 = dma.hbm_to_vmem [thread:$0]  %s0, 256, %s20, [#allocation3]
    $region5: #{tpu_custom_call.1} parent=1 // pred_fallthru
      _
    // Predicated region
    $region6: #{tpu_custom_call.1} parent=1 // pred_check
      _
    $region7: #{tpu_custom_call.1} parent=1 // pred_check_branch
      %24 = sbr.rel (0) target = $region9
    $region8: #{tpu_custom_call.1} parent=1 // pred_region
      %s26 = ssub.s32 8192, 8192
      %27 = vsyncadd [#allocation6], %s26
      %s28 = sshll.u32 [#allocation5], 4
      %s29 = int_to_ptr.vmem [resolvable:$true] %s28
      %34 = dma.hbm_to_vmem [thread:$0]  %s1, 8192, %s29, [#allocation6], 256, 256, 16
    $region9: #{tpu_custom_call.1} parent=1 // pred_fallthru
      _
    // Predicated region
    $region10: #{tpu_custom_call.1} parent=1 // pred_check
      _
    $region11: #{tpu_custom_call.1} parent=1 // pred_check_branch
      %36 = sbr.rel (0) target = $region13
    $region12: #{tpu_custom_call.1} parent=1 // pred_region
      _
    $region13: #{tpu_custom_call.1} parent=1 // pred_fallthru
      _
    // Predicated region
    $region14: #{tpu_custom_call.1} parent=1 // pred_check
      _
    $region15: #{tpu_custom_call.1} parent=1 // pred_check_branch
      %38 = sbr.rel (0) target = $region17
    $region16: #{tpu_custom_call.1} parent=1 // pred_region
      %s40 = ssub.s32 4096, 4096
      %41 = vsyncadd [#allocation6], %s40
      %s42 = sshll.u32 [#allocation7], 4
      %s43 = int_to_ptr.vmem [resolvable:$true] %s42
      %48 = dma.hbm_to_vmem [thread:$0]  %s3, 4096, %s43, [#allocation6], 128, 128, 8
    $region17: #{tpu_custom_call.1} parent=1 // pred_fallthru
      _
    // Predicated region
    $region18: #{tpu_custom_call.1} parent=1 // pred_check
      _
    $region19: #{tpu_custom_call.1} parent=1 // pred_check_branch
      %50 = sbr.rel (0) target = $region21
    $region20: #{tpu_custom_call.1} parent=1 // pred_region
      _
    $region21: #{tpu_custom_call.1} parent=1 // pred_fallthru
      _
    // Predicated region
    $region22: #{tpu_custom_call.1} parent=1 // pred_check
      _
    $region23: #{tpu_custom_call.1} parent=1 // pred_check_branch
      %52 = sbr.rel (0) target = $region25
    $region24: #{tpu_custom_call.1} parent=1 // pred_region
      %53 = dma.done [#allocation3], 256
    $region25: #{tpu_custom_call.1} parent=1 // pred_fallthru
      _
    // Predicated region
    $region26: #{tpu_custom_call.1} parent=1 // pred_check
      _
    $region27: #{tpu_custom_call.1} parent=1 // pred_check_branch
      %55 = sbr.rel (0) target = $region29
    $region28: #{tpu_custom_call.1} parent=1 // pred_region
      %56 = dma.done [#allocation6], 8192
    $region29: #{tpu_custom_call.1} parent=1 // pred_fallthru
      _
    // Predicated region
    $region30: #{tpu_custom_call.1} parent=1 // pred_check
      _
    $region31: #{tpu_custom_call.1} parent=1 // pred_check_branch
      %58 = sbr.rel (0) target = $region33
    $region32: #{tpu_custom_call.1} parent=1 // pred_region
      %59 = dma.done [#allocation6], 4096
    $region33: #{tpu_custom_call.1} parent=1 // pred_fallthru
      _
    %v60 = vld [vmem:[#allocation2] sm:$0xff]
    %v61 = vld [vmem:[#allocation2 + $0x8] sm:$0xff]
    %v62 = vld [vmem:[#allocation5] sm:$0xff]
    %v63 = vld [vmem:[#allocation5 + $0x8] sm:$0xff]
    %v64 = vld [vmem:[#allocation5 + $0x10] sm:$0xff]
    %v65 = vld [vmem:[#allocation5 + $0x18] sm:$0xff]
    %v66 = vld [vmem:[#allocation5 + $0x20] sm:$0xff]
    %v67 = vld [vmem:[#allocation5 + $0x28] sm:$0xff]
    %v68 = vld [vmem:[#allocation5 + $0x30] sm:$0xff]
    %v69 = vld [vmem:[#allocation5 + $0x38] sm:$0xff]
    %v70 = vld [vmem:[#allocation5 + $0x40] sm:$0xff]
    %v71 = vld [vmem:[#allocation5 + $0x48] sm:$0xff]
    %v72 = vld [vmem:[#allocation5 + $0x50] sm:$0xff]
    %v73 = vld [vmem:[#allocation5 + $0x58] sm:$0xff]
    %v74 = vld [vmem:[#allocation5 + $0x60] sm:$0xff]
    %v75 = vld [vmem:[#allocation5 + $0x68] sm:$0xff]
    %v76 = vld [vmem:[#allocation5 + $0x70] sm:$0xff]
    %v77 = vld [vmem:[#allocation5 + $0x78] sm:$0xff]
    %v78 = vld [vmem:[#allocation5 + $0x80] sm:$0xff]
    %v79 = vld [vmem:[#allocation5 + $0x88] sm:$0xff]
    %v80 = vld [vmem:[#allocation5 + $0x90] sm:$0xff]
    %v81 = vld [vmem:[#allocation5 + $0x98] sm:$0xff]
    %v82 = vld [vmem:[#allocation5 + $0xa0] sm:$0xff]
    %v83 = vld [vmem:[#allocation5 + $0xa8] sm:$0xff]
    %v84 = vld [vmem:[#allocation5 + $0xb0] sm:$0xff]
    %v85 = vld [vmem:[#allocation5 + $0xb8] sm:$0xff]
    %v86 = vld [vmem:[#allocation5 + $0xc0] sm:$0xff]
    %v87 = vld [vmem:[#allocation5 + $0xc8] sm:$0xff]
    %v88 = vld [vmem:[#allocation5 + $0xd0] sm:$0xff]
    %v89 = vld [vmem:[#allocation5 + $0xd8] sm:$0xff]
    %v90 = vld [vmem:[#allocation5 + $0xe0] sm:$0xff]
    %v91 = vld [vmem:[#allocation5 + $0xe8] sm:$0xff]
    %v92 = vld [vmem:[#allocation5 + $0xf0] sm:$0xff]
    %v93 = vld [vmem:[#allocation5 + $0xf8] sm:$0xff]
    %v94 = vld [vmem:[#allocation5 + $0x100] sm:$0xff]
    %v95 = vld [vmem:[#allocation5 + $0x108] sm:$0xff]
    %v96 = vld [vmem:[#allocation5 + $0x110] sm:$0xff]
    %v97 = vld [vmem:[#allocation5 + $0x118] sm:$0xff]
    %v98 = vld [vmem:[#allocation5 + $0x120] sm:$0xff]
    %v99 = vld [vmem:[#allocation5 + $0x128] sm:$0xff]
    %v100 = vld [vmem:[#allocation5 + $0x130] sm:$0xff]
    %v101 = vld [vmem:[#allocation5 + $0x138] sm:$0xff]
    %v102 = vld [vmem:[#allocation5 + $0x140] sm:$0xff]
    %v103 = vld [vmem:[#allocation5 + $0x148] sm:$0xff]
    %v104 = vld [vmem:[#allocation5 + $0x150] sm:$0xff]
    %v105 = vld [vmem:[#allocation5 + $0x158] sm:$0xff]
    %v106 = vld [vmem:[#allocation5 + $0x160] sm:$0xff]
    %v107 = vld [vmem:[#allocation5 + $0x168] sm:$0xff]
    %v108 = vld [vmem:[#allocation5 + $0x170] sm:$0xff]
    %v109 = vld [vmem:[#allocation5 + $0x178] sm:$0xff]
    %v110 = vld [vmem:[#allocation5 + $0x180] sm:$0xff]
    %v111 = vld [vmem:[#allocation5 + $0x188] sm:$0xff]
    %v112 = vld [vmem:[#allocation5 + $0x190] sm:$0xff]
    %v113 = vld [vmem:[#allocation5 + $0x198] sm:$0xff]
    %v114 = vld [vmem:[#allocation5 + $0x1a0] sm:$0xff]
    %v115 = vld [vmem:[#allocation5 + $0x1a8] sm:$0xff]
    %v116 = vld [vmem:[#allocation5 + $0x1b0] sm:$0xff]
    %v117 = vld [vmem:[#allocation5 + $0x1b8] sm:$0xff]
    %v118 = vld [vmem:[#allocation5 + $0x1c0] sm:$0xff]
    %v119 = vld [vmem:[#allocation5 + $0x1c8] sm:$0xff]
    %v120 = vld [vmem:[#allocation5 + $0x1d0] sm:$0xff]
    %v121 = vld [vmem:[#allocation5 + $0x1d8] sm:$0xff]
    %v122 = vld [vmem:[#allocation5 + $0x1e0] sm:$0xff]
    %v123 = vld [vmem:[#allocation5 + $0x1e8] sm:$0xff]
    %v124 = vld [vmem:[#allocation5 + $0x1f0] sm:$0xff]
    %v125 = vld [vmem:[#allocation5 + $0x1f8] sm:$0xff]
    %v126 = vld [vmem:[%s2] sm:$0x3]
    %v128 = vlaneseq
    %v129 = vshrl.u32 %v128, 7
    %v130 = vsub.s32 0, %v129
    %v131 = vrot.slane %v126, %v130
    %v132 = vlaneseq
    %v133 = vshrl.u32 %v132, 7
    %v134 = vsub.s32 1, %v133
    %v135 = vrot.slane %v126, %v134
    %138 = vmatprep.subr.mxu0 %v93
    %139 = vmatpush1.msra.mxu0 %v92
    %140 = vmatprep.subr.mxu0 %v91
    %141 = vmatpush1.msra.mxu0 %v90
    %142 = vmatprep.subr.mxu0 %v89
    %143 = vmatpush1.msra.mxu0 %v88
    %144 = vmatprep.subr.mxu0 %v87
    %145 = vmatpush1.msra.mxu0 %v86
    %146 = vmatprep.subr.mxu0 %v85
    %147 = vmatpush1.msra.mxu0 %v84
    %148 = vmatprep.subr.mxu0 %v83
    %149 = vmatpush1.msra.mxu0 %v82
    %150 = vmatprep.subr.mxu0 %v81
    %151 = vmatpush1.msra.mxu0 %v80
    %152 = vmatprep.subr.mxu0 %v79
    %153 = vmatpush1.msra.mxu0 %v78
    %154 = vmatprep.subr.mxu0 %v77
    %155 = vmatpush1.msra.mxu0 %v76
    %156 = vmatprep.subr.mxu0 %v75
    %157 = vmatpush1.msra.mxu0 %v74
    %158 = vmatprep.subr.mxu0 %v73
    %159 = vmatpush1.msra.mxu0 %v72
    %160 = vmatprep.subr.mxu0 %v71
    %161 = vmatpush1.msra.mxu0 %v70
    %162 = vmatprep.subr.mxu0 %v69
    %163 = vmatpush1.msra.mxu0 %v68
    %164 = vmatprep.subr.mxu0 %v67
    %165 = vmatpush1.msra.mxu0 %v66
    %166 = vmatprep.subr.mxu0 %v65
    %167 = vmatpush1.msra.mxu0 %v64
    %168 = vmatprep.subr.mxu0 %v63
    %169 = vmatpush1.msra.mxu0 %v62
    %170 = vmatprep.subr.mxu0 %v125
    %171 = vmatpush2.msra.mxu0 %v124
    %172 = vmatprep.subr.mxu0 %v123
    %173 = vmatpush2.msra.mxu0 %v122
    %174 = vmatprep.subr.mxu0 %v121
    %175 = vmatpush2.msra.mxu0 %v120
    %176 = vmatprep.subr.mxu0 %v119
    %177 = vmatpush2.msra.mxu0 %v118
    %178 = vmatprep.subr.mxu0 %v117
    %179 = vmatpush2.msra.mxu0 %v116
    %180 = vmatprep.subr.mxu0 %v115
    %181 = vmatpush2.msra.mxu0 %v114
    %182 = vmatprep.subr.mxu0 %v113
    %183 = vmatpush2.msra.mxu0 %v112
    %184 = vmatprep.subr.mxu0 %v111
    %185 = vmatpush2.msra.mxu0 %v110
    %186 = vmatprep.subr.mxu0 %v109
    %187 = vmatpush2.msra.mxu0 %v108
    %188 = vmatprep.subr.mxu0 %v107
    %189 = vmatpush2.msra.mxu0 %v106
    %190 = vmatprep.subr.mxu0 %v105
    %191 = vmatpush2.msra.mxu0 %v104
    %192 = vmatprep.subr.mxu0 %v103
    %193 = vmatpush2.msra.mxu0 %v102
    %194 = vmatprep.subr.mxu0 %v101
    %195 = vmatpush2.msra.mxu0 %v100
    %196 = vmatprep.subr.mxu0 %v99
    %197 = vmatpush2.msra.mxu0 %v98
    %198 = vmatprep.subr.mxu0 %v97
    %199 = vmatpush2.msra.mxu0 %v96
    %200 = vmatprep.subr.mxu0 %v95
    %201 = vmatpush2.msra.mxu0 %v94
    %202 = vmatprep.mubr.f32.mxu0 %v61
    %203 = vmatmul.mubr.f32.gmra.mxu0 %v60
    %v204 = vpop.f32.mrf.mxu0
    %v205 = vadd.f32 %v131, %v204
    %v206 = vpop.f32.mrf.mxu0
    %v207 = vadd.f32 %v135, %v206
    %208 = vdwg.mxu0
    %v209 = vmax.f32 %v205, 0.0
    %v210 = vmax.f32 %v207, 0.0
    %v211 = vld [vmem:[#allocation7] sm:$0xff]
    %v212 = vld [vmem:[#allocation7 + $0x8] sm:$0xff]
    %v213 = vld [vmem:[#allocation7 + $0x10] sm:$0xff]
    %v214 = vld [vmem:[#allocation7 + $0x18] sm:$0xff]
    %v215 = vld [vmem:[#allocation7 + $0x20] sm:$0xff]
    %v216 = vld [vmem:[#allocation7 + $0x28] sm:$0xff]
    %v217 = vld [vmem:[#allocation7 + $0x30] sm:$0xff]
    %v218 = vld [vmem:[#allocation7 + $0x38] sm:$0xff]
    %v219 = vld [vmem:[#allocation7 + $0x40] sm:$0xff]
    %v220 = vld [vmem:[#allocation7 + $0x48] sm:$0xff]
    %v221 = vld [vmem:[#allocation7 + $0x50] sm:$0xff]
    %v222 = vld [vmem:[#allocation7 + $0x58] sm:$0xff]
    %v223 = vld [vmem:[#allocation7 + $0x60] sm:$0xff]
    %v224 = vld [vmem:[#allocation7 + $0x68] sm:$0xff]
    %v225 = vld [vmem:[#allocation7 + $0x70] sm:$0xff]
    %v226 = vld [vmem:[#allocation7 + $0x78] sm:$0xff]
    %v227 = vld [vmem:[#allocation7 + $0x80] sm:$0xff]
    %v228 = vld [vmem:[#allocation7 + $0x88] sm:$0xff]
    %v229 = vld [vmem:[#allocation7 + $0x90] sm:$0xff]
    %v230 = vld [vmem:[#allocation7 + $0x98] sm:$0xff]
    %v231 = vld [vmem:[#allocation7 + $0xa0] sm:$0xff]
    %v232 = vld [vmem:[#allocation7 + $0xa8] sm:$0xff]
    %v233 = vld [vmem:[#allocation7 + $0xb0] sm:$0xff]
    %v234 = vld [vmem:[#allocation7 + $0xb8] sm:$0xff]
    %v235 = vld [vmem:[#allocation7 + $0xc0] sm:$0xff]
    %v236 = vld [vmem:[#allocation7 + $0xc8] sm:$0xff]
    %v237 = vld [vmem:[#allocation7 + $0xd0] sm:$0xff]
    %v238 = vld [vmem:[#allocation7 + $0xd8] sm:$0xff]
    %v239 = vld [vmem:[#allocation7 + $0xe0] sm:$0xff]
    %v240 = vld [vmem:[#allocation7 + $0xe8] sm:$0xff]
    %v241 = vld [vmem:[#allocation7 + $0xf0] sm:$0xff]
    %v242 = vld [vmem:[#allocation7 + $0xf8] sm:$0xff]
    %v243 = vld [vmem:[%s4] sm:$0x1]
    %v245 = vlaneseq
    %v246 = vshrl.u32 %v245, 7
    %v247 = vsub.s32 0, %v246
    %v248 = vrot.slane %v243, %v247
    %250 = vmatprep.subr.mxu0 0.0
    %251 = vmatpush1.msra.mxu0 %v226
    %252 = vmatprep.subr.mxu0 0.0
    %253 = vmatpush1.msra.mxu0 %v225
    %254 = vmatprep.subr.mxu0 0.0
    %255 = vmatpush1.msra.mxu0 %v224
    %256 = vmatprep.subr.mxu0 0.0
    %257 = vmatpush1.msra.mxu0 %v223
    %258 = vmatprep.subr.mxu0 0.0
    %259 = vmatpush1.msra.mxu0 %v222
    %260 = vmatprep.subr.mxu0 0.0
    %261 = vmatpush1.msra.mxu0 %v221
    %262 = vmatprep.subr.mxu0 0.0
    %263 = vmatpush1.msra.mxu0 %v220
    %264 = vmatprep.subr.mxu0 0.0
    %265 = vmatpush1.msra.mxu0 %v219
    %266 = vmatprep.subr.mxu0 0.0
    %267 = vmatpush1.msra.mxu0 %v218
    %268 = vmatprep.subr.mxu0 0.0
    %269 = vmatpush1.msra.mxu0 %v217
    %270 = vmatprep.subr.mxu0 0.0
    %271 = vmatpush1.msra.mxu0 %v216
    %272 = vmatprep.subr.mxu0 0.0
    %273 = vmatpush1.msra.mxu0 %v215
    %274 = vmatprep.subr.mxu0 0.0
    %275 = vmatpush1.msra.mxu0 %v214
    %276 = vmatprep.subr.mxu0 0.0
    %277 = vmatpush1.msra.mxu0 %v213
    %278 = vmatprep.subr.mxu0 0.0
    %279 = vmatpush1.msra.mxu0 %v212
    %280 = vmatprep.subr.mxu0 0.0
    %281 = vmatpush1.msra.mxu0 %v211
    %282 = vmatprep.subr.mxu0 0.0
    %283 = vmatpush2.msra.mxu0 %v242
    %284 = vmatprep.subr.mxu0 0.0
    %285 = vmatpush2.msra.mxu0 %v241
    %286 = vmatprep.subr.mxu0 0.0
    %287 = vmatpush2.msra.mxu0 %v240
    %288 = vmatprep.subr.mxu0 0.0
    %289 = vmatpush2.msra.mxu0 %v239
    %290 = vmatprep.subr.mxu0 0.0
    %291 = vmatpush2.msra.mxu0 %v238
    %292 = vmatprep.subr.mxu0 0.0
    %293 = vmatpush2.msra.mxu0 %v237
    %294 = vmatprep.subr.mxu0 0.0
    %295 = vmatpush2.msra.mxu0 %v236
    %296 = vmatprep.subr.mxu0 0.0
    %297 = vmatpush2.msra.mxu0 %v235
    %298 = vmatprep.subr.mxu0 0.0
    %299 = vmatpush2.msra.mxu0 %v234
    %300 = vmatprep.subr.mxu0 0.0
    %301 = vmatpush2.msra.mxu0 %v233
    %302 = vmatprep.subr.mxu0 0.0
    %303 = vmatpush2.msra.mxu0 %v232
    %304 = vmatprep.subr.mxu0 0.0
    %305 = vmatpush2.msra.mxu0 %v231
    %306 = vmatprep.subr.mxu0 0.0
    %307 = vmatpush2.msra.mxu0 %v230
    %308 = vmatprep.subr.mxu0 0.0
    %309 = vmatpush2.msra.mxu0 %v229
    %310 = vmatprep.subr.mxu0 0.0
    %311 = vmatpush2.msra.mxu0 %v228
    %312 = vmatprep.subr.mxu0 0.0
    %313 = vmatpush2.msra.mxu0 %v227
    %314 = vmatprep.mubr.f32.mxu0 %v210
    %315 = vmatmul.mubr.f32.gmra.mxu0 %v209
    %v316 = vpop.f32.mrf.mxu0
    %v317 = vadd.f32 %v248, %v316
    %v318 = vpop.f32.mrf.mxu0
    %319 = vdwg.mxu0
    %320 = vst [vmem:[#allocation8] sm:$0xff] %v317
    // Predicated region
    $region34: #{tpu_custom_call.1} parent=1 // pred_check
      _
    $region35: #{tpu_custom_call.1} parent=1 // pred_check_branch
      %322 = sbr.rel (0) target = $region37
    $region36: #{tpu_custom_call.1} parent=1 // pred_region
      %s324 = ssub.s32 128, 128
      %325 = vsyncadd [#allocation4], %s324
      %s327 = sshll.u32 [#allocation8], 4
      %s328 = int_to_ptr.vmem [resolvable:$true] %s327
      %330 = dma.vmem_to_hbm [thread:$0]  %s328, 128, %s5, [#allocation4]
    $region37: #{tpu_custom_call.1} parent=1 // pred_fallthru
      _
    // Predicated region
    $region38: #{tpu_custom_call.1} parent=1 // pred_check
      _
    $region39: #{tpu_custom_call.1} parent=1 // pred_check_branch
      %332 = sbr.rel (0) target = $region41
    $region40: #{tpu_custom_call.1} parent=1 // pred_region
      %333 = dma.done [#allocation4], 128
    $region41: #{tpu_custom_call.1} parent=1 // pred_fallthru
      _
    %334 = vsyncpa [#allocation3], 1
    %335 = vsyncpa [#allocation6], 1
    %336 = vsyncpa [#allocation4], 1

</llo_original>
